<compile_context>
chip_gen: v7x
topology: tpu7x:2x2x1
jax: 0.10.0
libtpu: 0.0.40
codegen_flags: <defaults>
</compile_context>

<pallas_src>
import functools

import jax
import jax.numpy as jnp
from jax.experimental import pallas as pl
from jax.experimental.pallas import tpu as pltpu


def _round_up(v, m):
    return (v + m - 1) // m * m


def _linear_block_kernel(*refs, add_bias, apply_relu, apply_bn, eps,
                         valid_rows, mask_rows, single_k):
    # Operand layout is static (flags decide which params are passed).
    idx = 0
    x_ref = refs[idx]; idx += 1            # (B_pad, TK)
    w_ref = refs[idx]; idx += 1            # (TK, TN)  -- already transposed
    b_ref = None
    if add_bias:
        b_ref = refs[idx]; idx += 1        # (1, TN)
    g_ref = bt_ref = None
    if apply_bn:
        g_ref = refs[idx]; idx += 1        # (1, TN)
        bt_ref = refs[idx]; idx += 1       # (1, TN)
    o_ref = refs[idx]; idx += 1            # (B_pad, TN)
    acc_ref = None if single_k else refs[idx]   # (B_pad, TN) f32 scratch

    def epilogue(y):                       # y: (B_pad, TN) f32
        if add_bias:
            y = y + b_ref[...]
        if apply_relu:
            y = jnp.maximum(y, 0.0)
        if apply_bn:
            inv_b = 1.0 / float(valid_rows)
            if mask_rows:
                rows = jax.lax.broadcasted_iota(jnp.int32, y.shape, 0)
                mask = (rows < valid_rows).astype(jnp.float32)
                mean = jnp.sum(y * mask, axis=0, keepdims=True) * inv_b
                centered = (y - mean) * mask
            else:
                mean = jnp.sum(y, axis=0, keepdims=True) * inv_b
                centered = y - mean
            var = jnp.sum(centered * centered, axis=0, keepdims=True) * inv_b
            inv_std = jax.lax.rsqrt(var + eps)            # f32, EUP
            scale = g_ref[...] * inv_std                  # (1, TN)
            shift = bt_ref[...] - mean * scale            # (1, TN)
            y = y * scale + shift                         # one FMA / element
        o_ref[...] = y.astype(o_ref.dtype)

    if single_k:
        # Whole reduction fits in one tile: no accumulator round-trip.
        epilogue(jnp.dot(x_ref[...], w_ref[...],
                         preferred_element_type=jnp.float32))
    else:
        k = pl.program_id(1)
        nk = pl.num_programs(1)

        @pl.when(k == 0)
        def _():
            acc_ref[...] = jnp.zeros_like(acc_ref)

        # MXU matmul, accumulate over the in_f reduction axis in f32.
        acc_ref[...] += jnp.dot(x_ref[...], w_ref[...],
                                preferred_element_type=jnp.float32)

        @pl.when(k == nk - 1)
        def _():
            epilogue(acc_ref[...])


def linear_block(x, weight, bias, gamma=None, beta=None, *, activation=False,
                 batch_norm=True, eps=1e-5):
    """Forward of LinearBlock. x: (B, in_f), weight: (out_f, in_f) (PyTorch)."""
    B, in_f = x.shape
    out_f = weight.shape[0]
    dtype = x.dtype
    itemsize = jnp.dtype(dtype).itemsize

    apply_relu = bool(activation)
    apply_bn = bool(batch_norm)
    # Bias immediately before train-mode BN (no ReLU between) is cancelled by
    # the mean subtraction -> skip the add and its DMA stream (same output).
    add_bias = (not apply_bn) or apply_relu

    # Tile sizes: lane-dense (multiples of 128); padded dims are divisible.
    TN = 128 if out_f <= 128 else 256
    TK = 128 if in_f <= 128 else 512
    SUB = max(8, 32 // itemsize)              # sublane multiple for this dtype
    B_pad = _round_up(B, SUB)
    in_p = _round_up(in_f, TK)
    out_p = _round_up(out_f, TN)
    nk = in_p // TK
    single_k = (nk == 1)

    # One-time wrapper-side transpose + zero padding (outside the kernel).
    w_t = jnp.zeros((in_p, out_p), dtype).at[:in_f, :out_f].set(
        weight.astype(dtype).T)
    x_p = x
    if (B_pad, in_p) != (B, in_f):
        x_p = jnp.zeros((B_pad, in_p), dtype).at[:B, :in_f].set(x)

    operands = [x_p, w_t]
    in_specs = [
        pl.BlockSpec((B_pad, TK), lambda j, k: (0, k)),
        pl.BlockSpec((TK, TN), lambda j, k: (k, j)),
    ]
    if add_bias:
        b_p = jnp.zeros((1, out_p), jnp.float32).at[0, :out_f].set(
            bias.astype(jnp.float32))
        operands.append(b_p)
        in_specs.append(pl.BlockSpec((1, TN), lambda j, k: (0, j)))
    if apply_bn:
        g_p = jnp.ones((1, out_p), jnp.float32).at[0, :out_f].set(
            gamma.astype(jnp.float32))
        bt_p = jnp.zeros((1, out_p), jnp.float32).at[0, :out_f].set(
            beta.astype(jnp.float32))
        operands += [g_p, bt_p]
        in_specs += [pl.BlockSpec((1, TN), lambda j, k: (0, j)),
                     pl.BlockSpec((1, TN), lambda j, k: (0, j))]

    grid = (out_p // TN, nk)
    scratch_shapes = [] if single_k else [pltpu.VMEM((B_pad, TN), jnp.float32)]

    # VMEM budget: double-buffered tiles (+ optional f32 accumulator), 2x headroom.
    tile_bytes = 2 * (B_pad * TK * itemsize + TK * TN * itemsize
                      + B_pad * TN * itemsize)
    tile_bytes += 2 * (len(operands) - 2) * TN * 4
    if not single_k:
        tile_bytes += B_pad * TN * 4
    vmem_limit = int(min(max(2 * tile_bytes, 8 << 20), 64 << 20))

    kernel = functools.partial(
        _linear_block_kernel, add_bias=add_bias, apply_relu=apply_relu,
        apply_bn=apply_bn, eps=float(eps), valid_rows=B,
        mask_rows=(B_pad != B), single_k=single_k)

    out_full = pl.pallas_call(
        kernel,
        out_shape=jax.ShapeDtypeStruct((B_pad, out_p), dtype),
        grid_spec=pltpu.PrefetchScalarGridSpec(
            num_scalar_prefetch=0,
            grid=grid,
            in_specs=in_specs,
            out_specs=pl.BlockSpec((B_pad, TN), lambda j, k: (0, j)),
            scratch_shapes=scratch_shapes),
        compiler_params=pltpu.CompilerParams(
            dimension_semantics=("parallel", "arbitrary"),
            vmem_limit_bytes=vmem_limit),
    )(*operands)

    return out_full[:B, :out_f]


def _reference(x, weight, bias, gamma, beta, activation=False,
               batch_norm=True, eps=1e-5):
    y = x @ weight.T + bias
    if activation:
        y = jnp.maximum(y, 0.0)
    if batch_norm:
        mean = jnp.mean(y, axis=0, keepdims=True)
        var = jnp.mean((y - mean) ** 2, axis=0, keepdims=True)
        y = (y - mean) / jnp.sqrt(var + eps) * gamma + beta
    return y


if __name__ == "__main__":
    # Small shapes consistent with an MLP linear block.
    B, IN_F, OUT_F = 8, 32, 64

    key = jax.random.PRNGKey(0)
    kx, kw, kb = jax.random.split(key, 3)

    x = jax.random.normal(kx, (B, IN_F), dtype=jnp.float32)
    # nn.Linear-shaped params: weight (out, in), bias (out,).
    bound = 1.0 / (IN_F ** 0.5)
    weight = jax.random.uniform(kw, (OUT_F, IN_F), jnp.float32, -bound, bound)
    bias = jax.random.uniform(kb, (OUT_F,), jnp.float32, -bound, bound)
    # BatchNorm1d default init: gamma = 1, beta = 0.
    gamma = jnp.ones((OUT_F,), jnp.float32)
    beta = jnp.zeros((OUT_F,), jnp.float32)

    # Default module config: Linear -> BatchNorm1d (train mode).
    out = jax.block_until_ready(
        linear_block(x, weight, bias, gamma, beta,
                     activation=False, batch_norm=True))
    ref = _reference(x, weight, bias, gamma, beta, False, True)
    assert out.shape == (B, OUT_F)
    assert jnp.allclose(out, ref, atol=1e-4, rtol=1e-4)

    # ReLU + BN path (bias must be kept before the ReLU).
    out2 = jax.block_until_ready(
        linear_block(x, weight, bias, gamma, beta,
                     activation=True, batch_norm=True))
    ref2 = _reference(x, weight, bias, gamma, beta, True, True)
    assert jnp.allclose(out2, ref2, atol=1e-4, rtol=1e-4)

    # batch_norm=False is a genuine plain Linear forward.
    out3 = jax.block_until_ready(
        linear_block(x, weight, bias, activation=False, batch_norm=False))
    ref3 = x @ weight.T + bias
    assert jnp.allclose(out3, ref3, atol=1e-4, rtol=1e-4)

    # Non-sublane-aligned batch exercises the padded-row masking of BN stats.
    out4 = jax.block_until_ready(
        linear_block(x[:6], weight, bias, gamma, beta,
                     activation=False, batch_norm=True))
    ref4 = _reference(x[:6], weight, bias, gamma, beta, False, True)
    assert jnp.allclose(out4, ref4, atol=1e-4, rtol=1e-4)

    # Larger reduction dim exercises the multi-K accumulator path.
    IN_BIG = 600
    kx2, kw2 = jax.random.split(kb)
    x_big = jax.random.normal(kx2, (B, IN_BIG), dtype=jnp.float32)
    w_big = jax.random.uniform(kw2, (OUT_F, IN_BIG), jnp.float32,
                               -1.0 / (IN_BIG ** 0.5), 1.0 / (IN_BIG ** 0.5))
    out5 = jax.block_until_ready(
        linear_block(x_big, w_big, bias, gamma, beta,
                     activation=True, batch_norm=True))
    ref5 = _reference(x_big, w_big, bias, gamma, beta, True, True)
    assert jnp.allclose(out5, ref5, atol=1e-4, rtol=1e-4)

    print("KERNEL_OK")
</pallas_src>

<mosaic_0001>
module attributes {stable_mosaic.version = 11 : i64} {
  func.func @_linear_block_kernel(%arg0: i32, %arg1: i32, %arg2: memref<8x128xf32, #tpu.memory_space<vmem>>, %arg3: memref<128x128xf32, #tpu.memory_space<vmem>>, %arg4: memref<1x128xf32, #tpu.memory_space<vmem>>, %arg5: memref<1x128xf32, #tpu.memory_space<vmem>>, %arg6: memref<8x128xf32, #tpu.memory_space<vmem>>) attributes {dimension_semantics = [#tpu.dimension_semantics<parallel>, #tpu.dimension_semantics<arbitrary>], iteration_bounds = array<i64: 1, 1>, scalar_prefetch = 0 : i64, scratch_operands = 0 : i64, tpu.core_type = #tpu.core_type<tc>, window_params = [{transform_indices = @transform_0, window_bounds = array<i64: 8, 128>}, {transform_indices = @transform_1, window_bounds = array<i64: 128, 128>}, {transform_indices = @transform_2, window_bounds = array<i64: 1, 128>}, {transform_indices = @transform_3, window_bounds = array<i64: 1, 128>}, {transform_indices = @transform_4, window_bounds = array<i64: 8, 128>}]} {
    %c0 = arith.constant 0 : index
    %c0_0 = arith.constant 0 : index
    %0 = vector.load %arg2[%c0, %c0_0] : memref<8x128xf32, #tpu.memory_space<vmem>>, vector<8x128xf32>
    %c0_1 = arith.constant 0 : index
    %c0_2 = arith.constant 0 : index
    %1 = vector.load %arg3[%c0_1, %c0_2] : memref<128x128xf32, #tpu.memory_space<vmem>>, vector<128x128xf32>
    %cst = arith.constant dense<0.000000e+00> : vector<8x128xf32>
    %2 = tpu.matmul %0, %1, %cst {dimension_numbers = #tpu.dot_dimension_numbers<[1], [0], [0], [1], [0, 0, 1, 1], [], []>} : vector<8x128xf32>, vector<128x128xf32>, vector<8x128xf32> -> vector<8x128xf32>
    %cst_3 = arith.constant dense<0.000000e+00> : vector<128xf32>
    %3 = vector.multi_reduction <add>, %2, %cst_3 [0] : vector<8x128xf32> to vector<128xf32>
    %4 = vector.shape_cast %3 : vector<128xf32> to vector<1x128xf32>
    %cst_4 = arith.constant 1.250000e-01 : f32
    %5 = vector.broadcast %cst_4 : f32 to vector<1x128xf32>
    %6 = arith.mulf %4, %5 : vector<1x128xf32>
    %7 = vector.broadcast %6 : vector<1x128xf32> to vector<8x128xf32>
    %8 = arith.subf %2, %7 : vector<8x128xf32>
    %9 = arith.mulf %8, %8 : vector<8x128xf32>
    %cst_5 = arith.constant dense<0.000000e+00> : vector<128xf32>
    %10 = vector.multi_reduction <add>, %9, %cst_5 [0] : vector<8x128xf32> to vector<128xf32>
    %11 = vector.shape_cast %10 : vector<128xf32> to vector<1x128xf32>
    %cst_6 = arith.constant 1.250000e-01 : f32
    %12 = vector.broadcast %cst_6 : f32 to vector<1x128xf32>
    %13 = arith.mulf %11, %12 : vector<1x128xf32>
    %cst_7 = arith.constant 9.99999974E-6 : f32
    %14 = vector.broadcast %cst_7 : f32 to vector<1x128xf32>
    %15 = arith.addf %13, %14 : vector<1x128xf32>
    %16 = math.rsqrt %15 : vector<1x128xf32>
    %c0_8 = arith.constant 0 : index
    %c0_9 = arith.constant 0 : index
    %17 = vector.load %arg4[%c0_8, %c0_9] : memref<1x128xf32, #tpu.memory_space<vmem>>, vector<1x128xf32>
    %18 = arith.mulf %17, %16 : vector<1x128xf32>
    %c0_10 = arith.constant 0 : index
    %c0_11 = arith.constant 0 : index
    %19 = vector.load %arg5[%c0_10, %c0_11] : memref<1x128xf32, #tpu.memory_space<vmem>>, vector<1x128xf32>
    %20 = arith.mulf %6, %18 : vector<1x128xf32>
    %21 = arith.subf %19, %20 : vector<1x128xf32>
    %22 = vector.broadcast %18 : vector<1x128xf32> to vector<8x128xf32>
    %23 = arith.mulf %2, %22 : vector<8x128xf32>
    %24 = vector.broadcast %21 : vector<1x128xf32> to vector<8x128xf32>
    %25 = arith.addf %23, %24 : vector<8x128xf32>
    %c0_12 = arith.constant 0 : index
    %c0_13 = arith.constant 0 : index
    %26 = vector.load %arg6[%c0_12, %c0_13] : memref<8x128xf32, #tpu.memory_space<vmem>>, vector<8x128xf32>
    tpu.vector_store %arg6[%c0_12, %c0_13], %25 {strides = array<i32>} : memref<8x128xf32, #tpu.memory_space<vmem>>, vector<8x128xf32>,
    return
  }
  func.func @transform_0(%arg0: i32, %arg1: i32) -> (i32, i32) {
    %c0_i32 = arith.constant 0 : i32
    %c0_i32_0 = arith.constant 0 : i32
    return %c0_i32, %arg1 : i32, i32
  }
  func.func @transform_1(%arg0: i32, %arg1: i32) -> (i32, i32) {
    %c0_i32 = arith.constant 0 : i32
    return %arg1, %arg0 : i32, i32
  }
  func.func @transform_2(%arg0: i32, %arg1: i32) -> (i32, i32) {
    %c0_i32 = arith.constant 0 : i32
    %c0_i32_0 = arith.constant 0 : i32
    return %c0_i32, %arg0 : i32, i32
  }
  func.func @transform_3(%arg0: i32, %arg1: i32) -> (i32, i32) {
    %c0_i32 = arith.constant 0 : i32
    %c0_i32_0 = arith.constant 0 : i32
    return %c0_i32, %arg0 : i32, i32
  }
  func.func @transform_4(%arg0: i32, %arg1: i32) -> (i32, i32) {
    %c0_i32 = arith.constant 0 : i32
    %c0_i32_0 = arith.constant 0 : i32
    return %c0_i32, %arg0 : i32, i32
  }
}

</mosaic_0001>

<llo_original>
// kernel: tpu_custom_call.1
$region0: #{tpu_custom_call.1}
  #allocation0 [shape = 'u32[]', space=smem, size = 0x4, offset = 0x4, fixed_abs, tag = 'smem constant byte address 0x4 - core index']
  #allocation1 [shape = 'u32[144,128]{1,0:T(1,128)}', space=vmem, size = 0x12000, scoped, tag = 'internal scratch']
  %s0 = inlined_call_operand.hbm [shape: f32[8,128], index: 0, kind: input, shape index: {}]
  %s1 = inlined_call_operand.hbm [shape: f32[128,128], index: 1, kind: input, shape index: {}]
  %s2 = inlined_call_operand.vmem [shape: f32[1,128], index: 2, kind: input, shape index: {}]
  %s3 = inlined_call_operand.vmem [shape: f32[1,128], index: 3, kind: input, shape index: {}]
  %s4 = inlined_call_operand.hbm [shape: f32[8,128], index: 4, kind: output, shape index: {}]
  %s5 = sld [smem:[#allocation0]]
  $region34: #{tpu_custom_call.1} parent=0
    _
  %s7 = ssub.s32 1, %s5
  %s8 = scalar_select 0, %s7, %s5
  $region1: #{tpu_custom_call.1} parent=0
    #allocation2 [shape = 'u8[4096]{0}', space=vmem, size = 0x1000, scoped, tag = 'input window, operand 0, single buffered']
    #allocation3 [shape = 's32[1]{0}', space=sflag, size = 0x4, scoped, tag = 'scoped memory for tpu_custom_call.1']
    #allocation4 [shape = 's32[1]{0}', space=sflag, size = 0x4, scoped, tag = 'scoped memory for tpu_custom_call.1']
    #allocation5 [shape = 'u8[65536]{0}', space=vmem, size = 0x10000, scoped, tag = 'input window, operand 1, single buffered']
    #allocation6 [shape = 's32[1]{0}', space=sflag, size = 0x4, scoped, tag = 'scoped memory for tpu_custom_call.1']
    #allocation7 [shape = 'u8[4096]{0}', space=vmem, size = 0x1000, scoped, tag = 'output window, operand 0, single buffered']
    %9 = vsyncpa [#allocation3], 0
    %10 = vsyncpa [#allocation6], 0
    %11 = vsyncpa [#allocation4], 0
    // Predicated region
    $region2: #{tpu_custom_call.1} parent=1 // pred_check
      _
    $region3: #{tpu_custom_call.1} parent=1 // pred_check_branch
      %13 = sbr.rel (0) target = $region5
    $region4: #{tpu_custom_call.1} parent=1 // pred_region
      %s15 = ssub.s32 128, 128
      %16 = vsyncadd [#allocation3], %s15
      %s18 = sshll.u32 [#allocation2], 4
      %s19 = int_to_ptr.vmem [resolvable:$true] %s18
      %21 = dma.hbm_to_vmem [thread:$0]  %s0, 128, %s19, [#allocation3]
    $region5: #{tpu_custom_call.1} parent=1 // pred_fallthru
      _
    // Predicated region
    $region6: #{tpu_custom_call.1} parent=1 // pred_check
      _
    $region7: #{tpu_custom_call.1} parent=1 // pred_check_branch
      %23 = sbr.rel (0) target = $region9
    $region8: #{tpu_custom_call.1} parent=1 // pred_region
      %s25 = ssub.s32 2048, 2048
      %26 = vsyncadd [#allocation6], %s25
      %s27 = sshll.u32 [#allocation5], 4
      %s28 = int_to_ptr.vmem [resolvable:$true] %s27
      %33 = dma.hbm_to_vmem [thread:$0]  %s1, 2048, %s28, [#allocation6], 128, 128, 8
    $region9: #{tpu_custom_call.1} parent=1 // pred_fallthru
      _
    // Predicated region
    $region10: #{tpu_custom_call.1} parent=1 // pred_check
      _
    $region11: #{tpu_custom_call.1} parent=1 // pred_check_branch
      %35 = sbr.rel (0) target = $region13
    $region12: #{tpu_custom_call.1} parent=1 // pred_region
      _
    $region13: #{tpu_custom_call.1} parent=1 // pred_fallthru
      _
    // Predicated region
    $region14: #{tpu_custom_call.1} parent=1 // pred_check
      _
    $region15: #{tpu_custom_call.1} parent=1 // pred_check_branch
      %37 = sbr.rel (0) target = $region17
    $region16: #{tpu_custom_call.1} parent=1 // pred_region
      _
    $region17: #{tpu_custom_call.1} parent=1 // pred_fallthru
      _
    // Predicated region
    $region18: #{tpu_custom_call.1} parent=1 // pred_check
      _
    $region19: #{tpu_custom_call.1} parent=1 // pred_check_branch
      %39 = sbr.rel (0) target = $region21
    $region20: #{tpu_custom_call.1} parent=1 // pred_region
      %40 = dma.done [#allocation3], 128
    $region21: #{tpu_custom_call.1} parent=1 // pred_fallthru
      _
    // Predicated region
    $region22: #{tpu_custom_call.1} parent=1 // pred_check
      _
    $region23: #{tpu_custom_call.1} parent=1 // pred_check_branch
      %42 = sbr.rel (0) target = $region25
    $region24: #{tpu_custom_call.1} parent=1 // pred_region
      %43 = dma.done [#allocation6], 2048
    $region25: #{tpu_custom_call.1} parent=1 // pred_fallthru
      _
    %v44 = vld [vmem:[#allocation2] sm:$0xff]
    %v45 = vld [vmem:[#allocation5] sm:$0xff]
    %v46 = vld [vmem:[#allocation5 + $0x8] sm:$0xff]
    %v47 = vld [vmem:[#allocation5 + $0x10] sm:$0xff]
    %v48 = vld [vmem:[#allocation5 + $0x18] sm:$0xff]
    %v49 = vld [vmem:[#allocation5 + $0x20] sm:$0xff]
    %v50 = vld [vmem:[#allocation5 + $0x28] sm:$0xff]
    %v51 = vld [vmem:[#allocation5 + $0x30] sm:$0xff]
    %v52 = vld [vmem:[#allocation5 + $0x38] sm:$0xff]
    %v53 = vld [vmem:[#allocation5 + $0x40] sm:$0xff]
    %v54 = vld [vmem:[#allocation5 + $0x48] sm:$0xff]
    %v55 = vld [vmem:[#allocation5 + $0x50] sm:$0xff]
    %v56 = vld [vmem:[#allocation5 + $0x58] sm:$0xff]
    %v57 = vld [vmem:[#allocation5 + $0x60] sm:$0xff]
    %v58 = vld [vmem:[#allocation5 + $0x68] sm:$0xff]
    %v59 = vld [vmem:[#allocation5 + $0x70] sm:$0xff]
    %v60 = vld [vmem:[#allocation5 + $0x78] sm:$0xff]
    %61 = vmatprep.subr.mxu0 0.0
    %62 = vmatpush1.msra.mxu0 %v45
    %63 = vmatprep.subr.mxu0 0.0
    %64 = vmatpush1.msra.mxu0 %v46
    %65 = vmatprep.subr.mxu0 0.0
    %66 = vmatpush1.msra.mxu0 %v47
    %67 = vmatprep.subr.mxu0 0.0
    %68 = vmatpush1.msra.mxu0 %v48
    %69 = vmatprep.subr.mxu0 0.0
    %70 = vmatpush1.msra.mxu0 %v49
    %71 = vmatprep.subr.mxu0 0.0
    %72 = vmatpush1.msra.mxu0 %v50
    %73 = vmatprep.subr.mxu0 0.0
    %74 = vmatpush1.msra.mxu0 %v51
    %75 = vmatprep.subr.mxu0 0.0
    %76 = vmatpush1.msra.mxu0 %v52
    %77 = vmatprep.subr.mxu0 0.0
    %78 = vmatpush1.msra.mxu0 %v53
    %79 = vmatprep.subr.mxu0 0.0
    %80 = vmatpush1.msra.mxu0 %v54
    %81 = vmatprep.subr.mxu0 0.0
    %82 = vmatpush1.msra.mxu0 %v55
    %83 = vmatprep.subr.mxu0 0.0
    %84 = vmatpush1.msra.mxu0 %v56
    %85 = vmatprep.subr.mxu0 0.0
    %86 = vmatpush1.msra.mxu0 %v57
    %87 = vmatprep.subr.mxu0 0.0
    %88 = vmatpush1.msra.mxu0 %v58
    %89 = vmatprep.subr.mxu0 0.0
    %90 = vmatpush1.msra.mxu0 %v59
    %91 = vmatprep.subr.mxu0 0.0
    %92 = vmatpush1.msra.mxu0 %v60
    %93 = vmatprep.subr.mxu0 0.0
    %94 = vmatpush1.msra.mxu0 0.0
    %95 = vmatprep.subr.mxu0 0.0
    %96 = vmatpush1.msra.mxu0 0.0
    %97 = vmatprep.subr.mxu0 0.0
    %98 = vmatpush1.msra.mxu0 0.0
    %99 = vmatprep.subr.mxu0 0.0
    %100 = vmatpush1.msra.mxu0 0.0
    %101 = vmatprep.subr.mxu0 0.0
    %102 = vmatpush1.msra.mxu0 0.0
    %103 = vmatprep.subr.mxu0 0.0
    %104 = vmatpush1.msra.mxu0 0.0
    %105 = vmatprep.subr.mxu0 0.0
    %106 = vmatpush1.msra.mxu0 0.0
    %107 = vmatprep.subr.mxu0 0.0
    %108 = vmatpush1.msra.mxu0 0.0
    %109 = vmatprep.subr.mxu0 0.0
    %110 = vmatpush1.msra.mxu0 0.0
    %111 = vmatprep.subr.mxu0 0.0
    %112 = vmatpush1.msra.mxu0 0.0
    %113 = vmatprep.subr.mxu0 0.0
    %114 = vmatpush1.msra.mxu0 0.0
    %115 = vmatprep.subr.mxu0 0.0
    %116 = vmatpush1.msra.mxu0 0.0
    %117 = vmatprep.subr.mxu0 0.0
    %118 = vmatpush1.msra.mxu0 0.0
    %119 = vmatprep.subr.mxu0 0.0
    %120 = vmatpush1.msra.mxu0 0.0
    %121 = vmatprep.subr.mxu0 0.0
    %122 = vmatpush1.msra.mxu0 0.0
    %123 = vmatprep.subr.mxu0 0.0
    %124 = vmatpush1.msra.mxu0 0.0
    %125 = vmatprep.mubr.f32.mxu0 0.0
    %126 = vmatmul.mubr.f32.gmra.mrb[0].mxu0 %v44
    %v127 = vpop.f32.mrb[0].mxu0
    %v128 = vadd.f32 0.0, %v127
    %v129 = vpop.f32.mrb[0].mxu0
    %130 = vdwg.mxu0
    %v131 = vrot.slane %v128, 4
    %v132 = vadd.f32 %v128, %v131
    %v133 = vrot.slane %v132, 2
    %v134 = vadd.f32 %v132, %v133
    %v135 = vrot.slane %v134, 1
    %v136 = vadd.f32 %v134, %v135
    %v137 = vmul.f32 %v136, 0.125
    %v138 = vsub.f32 %v128, %v137
    %v139 = vmul.f32 %v138, %v138
    %v140 = vrot.slane %v139, 4
    %v141 = vadd.f32 %v139, %v140
    %v142 = vrot.slane %v141, 2
    %v143 = vadd.f32 %v141, %v142
    %v144 = vrot.slane %v143, 1
    %v145 = vadd.f32 %v143, %v144
    %v146 = vmul.f32 %v145, 0.125
    %v147 = vadd.f32 %v146, 1e-05
    %v148 = vrsqrt.pop %v147
    %v149 = vld [vmem:[%s2] sm:$0x1]
    %v150 = vmul.f32 %v149, %v148
    %v151 = vld [vmem:[%s3] sm:$0x1]
    %v152 = vmul.f32 %v137, %v150
    %v153 = vsub.f32 %v151, %v152
    %v155 = vlaneseq
    %v156 = vshrl.u32 %v155, 7
    %v157 = vsub.s32 0, %v156
    %v158 = vrot.slane %v150, %v157
    %v160 = vmul.f32 %v128, %v158
    %v162 = vlaneseq
    %v163 = vshrl.u32 %v162, 7
    %v164 = vsub.s32 0, %v163
    %v165 = vrot.slane %v153, %v164
    %v167 = vadd.f32 %v160, %v165
    %168 = vst [vmem:[#allocation7] sm:$0xff] %v167
    // Predicated region
    $region26: #{tpu_custom_call.1} parent=1 // pred_check
      _
    $region27: #{tpu_custom_call.1} parent=1 // pred_check_branch
      %170 = sbr.rel (0) target = $region29
    $region28: #{tpu_custom_call.1} parent=1 // pred_region
      %s172 = ssub.s32 128, 128
      %173 = vsyncadd [#allocation4], %s172
      %s175 = sshll.u32 [#allocation7], 4
      %s176 = int_to_ptr.vmem [resolvable:$true] %s175
      %178 = dma.vmem_to_hbm [thread:$0]  %s176, 128, %s4, [#allocation4]
    $region29: #{tpu_custom_call.1} parent=1 // pred_fallthru
      _
    // Predicated region
    $region30: #{tpu_custom_call.1} parent=1 // pred_check
      _
    $region31: #{tpu_custom_call.1} parent=1 // pred_check_branch
      %180 = sbr.rel (0) target = $region33
    $region32: #{tpu_custom_call.1} parent=1 // pred_region
      %181 = dma.done [#allocation4], 128
    $region33: #{tpu_custom_call.1} parent=1 // pred_fallthru
      _
    %182 = vsyncpa [#allocation3], 1
    %183 = vsyncpa [#allocation6], 1
    %184 = vsyncpa [#allocation4], 1

</llo_original>
